<compile_context>
chip_gen: v7x
topology: tpu7x:2x2x1
jax: 0.10.0
libtpu: 0.0.40
codegen_flags: <defaults>
</compile_context>

<pallas_src>
import functools
import math

import jax
import jax.numpy as jnp
from jax.experimental import pallas as pl
from jax.experimental.pallas import tpu as pltpu


def _round_up(x, m):
    return ((x + m - 1) // m) * m


def _ffn_kernel(x_ref, w1_ref, b1_ref, w2_ref, b2_ref, o_ref, acc_ref):
    """Grid = (row tiles i, d_ff tiles k). k is the reduction axis."""
    k = pl.program_id(1)

    @pl.when(k == 0)
    def _():
        acc_ref[...] = jnp.zeros_like(acc_ref)

    # h_k = relu(x @ W1[:, k-tile] + b1[k-tile])  (ReLU is elementwise, so per-d_ff-tile is exact)
    h = jnp.dot(x_ref[...], w1_ref[...], preferred_element_type=jnp.float32)
    h = jnp.maximum(h + b1_ref[...].astype(jnp.float32), 0.0)
    # TODO(synk): nn.Dropout is identity in eval mode; training-mode dropout (PyTorch RNG
    #             semantics) is not reproduced here.
    # acc += h_k @ W2[k-tile, :]   (low-precision weights => h is cast to the weight dtype
    #                               for the MXU; accumulation stays f32)
    acc_ref[...] += jnp.dot(h.astype(w2_ref.dtype), w2_ref[...],
                            preferred_element_type=jnp.float32)

    @pl.when(k == pl.num_programs(1) - 1)
    def _():
        o_ref[...] = (acc_ref[...] + b2_ref[...].astype(jnp.float32)).astype(o_ref.dtype)


@functools.partial(jax.jit, static_argnames=("tm", "tf"))
def feed_forward(x, w1, b1, w2, b2, *, tm=None, tf=None):
    """x: [..., d_model]; w1: [d_model, d_ff]; b1: [d_ff]; w2: [d_ff, d_model]; b2: [d_model]."""
    *lead, D = x.shape
    d_ff = w1.shape[1]
    M = math.prod(lead) if lead else 1
    x2 = x.reshape(M, D)

    itemsize = jnp.dtype(x.dtype).itemsize
    # dtype-aware sublane packing floor: 8 (f32), 16 (bf16), 32 (int8/fp8).
    row_floor = max(8, 32 // max(itemsize, 1))

    # Row tile: big enough to feed the MXU, capped by (padded) M.
    if tm is None:
        tm = 256 if M >= 256 else _round_up(M, row_floor)
    tm = max(_round_up(tm, row_floor), row_floor)
    M_pad = _round_up(M, tm)
    if M_pad != M:
        x2 = jnp.pad(x2, ((0, M_pad - M), (0, 0)))

    # d_ff tile (reduction axis). Must be a multiple of 128 unless it is the full d_ff.
    if tf is None:
        tf = d_ff if d_ff <= 1024 else 1024
    if tf >= d_ff:
        tf = d_ff
    else:
        tf = min(_round_up(tf, 128), d_ff)
    F_pad = _round_up(d_ff, tf)
    w1p, b1p, w2p = w1, b1, w2
    if F_pad != d_ff:
        # Zero-padding d_ff is exact: relu(0 + 0) = 0 contributes nothing to the second matmul.
        w1p = jnp.pad(w1, ((0, 0), (0, F_pad - d_ff)))
        b1p = jnp.pad(b1, (0, F_pad - d_ff))
        w2p = jnp.pad(w2, ((0, F_pad - d_ff), (0, 0)))
    b1_2d = b1p.reshape(1, F_pad)
    b2_2d = b2.reshape(1, D)

    grid = (M_pad // tm, F_pad // tf)

    # VMEM budget: double-buffered in/out tiles + f32 accumulator, with headroom.
    def _bytes(shape, dt):
        return math.prod(shape) * jnp.dtype(dt).itemsize

    vmem_need = (
        2 * (_bytes((tm, D), x.dtype) + _bytes((D, tf), w1.dtype)
             + _bytes((1, tf), b1.dtype) + _bytes((tf, D), w2.dtype)
             + _bytes((1, D), b2.dtype) + _bytes((tm, D), x.dtype))
        + _bytes((tm, D), jnp.float32)
    )
    vmem_limit = int(min(max(2 * vmem_need, 32 * 1024 * 1024), 96 * 1024 * 1024))

    cost = pl.CostEstimate(
        flops=2 * 2 * M_pad * F_pad * D,
        transcendentals=0,
        bytes_accessed=(2 * _bytes((M, D), x.dtype) + _bytes((D, d_ff), w1.dtype)
                        + _bytes((d_ff,), b1.dtype) + _bytes((d_ff, D), w2.dtype)
                        + _bytes((D,), b2.dtype)),
    )

    out = pl.pallas_call(
        _ffn_kernel,
        out_shape=jax.ShapeDtypeStruct((M_pad, D), x.dtype),
        grid_spec=pltpu.PrefetchScalarGridSpec(
            num_scalar_prefetch=0,
            grid=grid,
            in_specs=[
                pl.BlockSpec((tm, D), lambda i, k: (i, 0)),   # x rows (held across k)
                pl.BlockSpec((D, tf), lambda i, k: (0, k)),   # W1 d_ff tile (streamed)
                pl.BlockSpec((1, tf), lambda i, k: (0, k)),   # b1 d_ff tile
                pl.BlockSpec((tf, D), lambda i, k: (k, 0)),   # W2 d_ff tile (streamed)
                pl.BlockSpec((1, D), lambda i, k: (0, 0)),    # b2
            ],
            out_specs=pl.BlockSpec((tm, D), lambda i, k: (i, 0)),  # resident across k
            scratch_shapes=[pltpu.VMEM((tm, D), jnp.float32)],
        ),
        compiler_params=pltpu.CompilerParams(
            dimension_semantics=("parallel", "arbitrary"),
            vmem_limit_bytes=vmem_limit,
        ),
        cost_estimate=cost,
    )(x2, w1p, b1_2d, w2p, b2_2d)

    out = out[:M]
    return out.reshape(x.shape)


def init_params(key, d_model, d_ff, dtype=jnp.float32):
    """Deterministic init mimicking nn.Linear's U(-1/sqrt(fan_in), 1/sqrt(fan_in))."""
    k1, k2, k3, k4 = jax.random.split(key, 4)
    bound1 = 1.0 / (d_model ** 0.5)
    bound2 = 1.0 / (d_ff ** 0.5)
    w1 = jax.random.uniform(k1, (d_model, d_ff), dtype, -bound1, bound1)
    b1 = jax.random.uniform(k2, (d_ff,), dtype, -bound1, bound1)
    w2 = jax.random.uniform(k3, (d_ff, d_model), dtype, -bound2, bound2)
    b2 = jax.random.uniform(k4, (d_model,), dtype, -bound2, bound2)
    return w1, b1, w2, b2


if __name__ == "__main__":
    key = jax.random.PRNGKey(0)
    k_x, k_p, k_x2 = jax.random.split(key, 3)

    # Lane-dense small shapes (d_model, d_ff multiples of 128), per perf review.
    B, S, d_model, d_ff = 2, 8, 128, 256
    x = jax.random.normal(k_x, (B, S, d_model), jnp.float32)
    w1, b1, w2, b2 = init_params(k_p, d_model, d_ff)

    # tf=128 -> two reduction steps, exercises the VMEM accumulator path.
    out = feed_forward(x, w1, b1, w2, b2, tf=128)
    jax.block_until_ready(out)

    ref = jnp.maximum(x @ w1 + b1, 0.0) @ w2 + b2
    assert out.shape == (B, S, d_model)
    assert jnp.allclose(out, ref, atol=1e-4, rtol=1e-4), float(jnp.max(jnp.abs(out - ref)))

    # Ragged row count (M not a multiple of the row tile) exercises wrapper padding.
    x_odd = jax.random.normal(k_x2, (3, 5, d_model), jnp.float32)
    out_odd = feed_forward(x_odd, w1, b1, w2, b2)
    jax.block_until_ready(out_odd)
    ref_odd = jnp.maximum(x_odd @ w1 + b1, 0.0) @ w2 + b2
    assert jnp.allclose(out_odd, ref_odd, atol=1e-4, rtol=1e-4)

    print("KERNEL_OK")
</pallas_src>

<mosaic_0001>
module attributes {stable_mosaic.version = 11 : i64} {
  func.func @_ffn_kernel(%arg0: i32, %arg1: i32, %arg2: memref<16x128xf32, #tpu.memory_space<vmem>>, %arg3: memref<128x128xf32, #tpu.memory_space<vmem>>, %arg4: memref<1x128xf32, #tpu.memory_space<vmem>>, %arg5: memref<128x128xf32, #tpu.memory_space<vmem>>, %arg6: memref<1x128xf32, #tpu.memory_space<vmem>>, %arg7: memref<16x128xf32, #tpu.memory_space<vmem>>, %arg8: memref<16x128xf32, #tpu.memory_space<vmem>>) attributes {dimension_semantics = [#tpu.dimension_semantics<parallel>, #tpu.dimension_semantics<arbitrary>], iteration_bounds = array<i64: 1, 2>, scalar_prefetch = 0 : i64, scratch_operands = 1 : i64, tpu.core_type = #tpu.core_type<tc>, window_params = [{transform_indices = @transform_0, window_bounds = array<i64: 16, 128>}, {transform_indices = @transform_1, window_bounds = array<i64: 128, 128>}, {transform_indices = @transform_2, window_bounds = array<i64: 1, 128>}, {transform_indices = @transform_3, window_bounds = array<i64: 128, 128>}, {pipeline_mode = #tpu.pipeline_mode<synchronous>, transform_indices = @transform_4, window_bounds = array<i64: 1, 128>}, {transform_indices = @transform_5, window_bounds = array<i64: 16, 128>}]} {
    %c0_i32 = arith.constant 0 : i32
    %0 = arith.cmpi eq, %arg1, %c0_i32 : i32
    %1 = arith.extui %0 : i1 to i32
    %c0_i32_0 = arith.constant 0 : i32
    %2 = arith.cmpi ne, %1, %c0_i32_0 : i32
    scf.if %2 {
      %cst_15 = arith.constant 0.000000e+00 : f32
      %19 = vector.broadcast %cst_15 : f32 to vector<16x128xf32>
      %c0_16 = arith.constant 0 : index
      %c0_17 = arith.constant 0 : index
      %20 = vector.load %arg8[%c0_16, %c0_17] : memref<16x128xf32, #tpu.memory_space<vmem>>, vector<16x128xf32>
      tpu.vector_store %arg8[%c0_16, %c0_17], %19 {strides = array<i32>} : memref<16x128xf32, #tpu.memory_space<vmem>>, vector<16x128xf32>,
    } else {
    }
    %c0 = arith.constant 0 : index
    %c0_1 = arith.constant 0 : index
    %3 = vector.load %arg2[%c0, %c0_1] : memref<16x128xf32, #tpu.memory_space<vmem>>, vector<16x128xf32>
    %c0_2 = arith.constant 0 : index
    %c0_3 = arith.constant 0 : index
    %4 = vector.load %arg3[%c0_2, %c0_3] : memref<128x128xf32, #tpu.memory_space<vmem>>, vector<128x128xf32>
    %cst = arith.constant dense<0.000000e+00> : vector<16x128xf32>
    %5 = tpu.matmul %3, %4, %cst {dimension_numbers = #tpu.dot_dimension_numbers<[1], [0], [0], [1], [0, 0, 1, 1], [], []>} : vector<16x128xf32>, vector<128x128xf32>, vector<16x128xf32> -> vector<16x128xf32>
    %c0_4 = arith.constant 0 : index
    %c0_5 = arith.constant 0 : index
    %6 = vector.load %arg4[%c0_4, %c0_5] : memref<1x128xf32, #tpu.memory_space<vmem>>, vector<1x128xf32>
    %7 = vector.broadcast %6 : vector<1x128xf32> to vector<16x128xf32>
    %8 = arith.addf %5, %7 : vector<16x128xf32>
    %cst_6 = arith.constant 0.000000e+00 : f32
    %9 = vector.broadcast %cst_6 : f32 to vector<16x128xf32>
    %10 = arith.maximumf %8, %9 : vector<16x128xf32>
    %c0_7 = arith.constant 0 : index
    %c0_8 = arith.constant 0 : index
    %11 = vector.load %arg8[%c0_7, %c0_8] : memref<16x128xf32, #tpu.memory_space<vmem>>, vector<16x128xf32>
    %c0_9 = arith.constant 0 : index
    %c0_10 = arith.constant 0 : index
    %12 = vector.load %arg5[%c0_9, %c0_10] : memref<128x128xf32, #tpu.memory_space<vmem>>, vector<128x128xf32>
    %cst_11 = arith.constant dense<0.000000e+00> : vector<16x128xf32>
    %13 = tpu.matmul %10, %12, %cst_11 {dimension_numbers = #tpu.dot_dimension_numbers<[1], [0], [0], [1], [0, 0, 1, 1], [], []>} : vector<16x128xf32>, vector<128x128xf32>, vector<16x128xf32> -> vector<16x128xf32>
    %14 = arith.addf %11, %13 : vector<16x128xf32>
    %c0_12 = arith.constant 0 : index
    %c0_13 = arith.constant 0 : index
    %15 = vector.load %arg8[%c0_12, %c0_13] : memref<16x128xf32, #tpu.memory_space<vmem>>, vector<16x128xf32>
    tpu.vector_store %arg8[%c0_12, %c0_13], %14 {strides = array<i32>} : memref<16x128xf32, #tpu.memory_space<vmem>>, vector<16x128xf32>,
    %c1_i32 = arith.constant 1 : i32
    %16 = arith.cmpi eq, %arg1, %c1_i32 : i32
    %17 = arith.extui %16 : i1 to i32
    %c0_i32_14 = arith.constant 0 : i32
    %18 = arith.cmpi ne, %17, %c0_i32_14 : i32
    scf.if %18 {
      %c0_15 = arith.constant 0 : index
      %c0_16 = arith.constant 0 : index
      %19 = vector.load %arg8[%c0_15, %c0_16] : memref<16x128xf32, #tpu.memory_space<vmem>>, vector<16x128xf32>
      %c0_17 = arith.constant 0 : index
      %c0_18 = arith.constant 0 : index
      %20 = vector.load %arg6[%c0_17, %c0_18] : memref<1x128xf32, #tpu.memory_space<vmem>>, vector<1x128xf32>
      %21 = vector.broadcast %20 : vector<1x128xf32> to vector<16x128xf32>
      %22 = arith.addf %19, %21 : vector<16x128xf32>
      %c0_19 = arith.constant 0 : index
      %c0_20 = arith.constant 0 : index
      %23 = vector.load %arg7[%c0_19, %c0_20] : memref<16x128xf32, #tpu.memory_space<vmem>>, vector<16x128xf32>
      tpu.vector_store %arg7[%c0_19, %c0_20], %22 {strides = array<i32>} : memref<16x128xf32, #tpu.memory_space<vmem>>, vector<16x128xf32>,
    } else {
    }
    return
  }
  func.func @transform_0(%arg0: i32, %arg1: i32) -> (i32, i32) {
    %c0_i32 = arith.constant 0 : i32
    %c0_i32_0 = arith.constant 0 : i32
    return %arg0, %c0_i32 : i32, i32
  }
  func.func @transform_1(%arg0: i32, %arg1: i32) -> (i32, i32) {
    %c0_i32 = arith.constant 0 : i32
    %c0_i32_0 = arith.constant 0 : i32
    return %c0_i32, %arg1 : i32, i32
  }
  func.func @transform_2(%arg0: i32, %arg1: i32) -> (i32, i32) {
    %c0_i32 = arith.constant 0 : i32
    %c0_i32_0 = arith.constant 0 : i32
    return %c0_i32, %arg1 : i32, i32
  }
  func.func @transform_3(%arg0: i32, %arg1: i32) -> (i32, i32) {
    %c0_i32 = arith.constant 0 : i32
    %c0_i32_0 = arith.constant 0 : i32
    return %arg1, %c0_i32 : i32, i32
  }
  func.func @transform_4(%arg0: i32, %arg1: i32) -> (i32, i32) {
    %c0_i32 = arith.constant 0 : i32
    %c0_i32_0 = arith.constant 0 : i32
    %c0_i32_1 = arith.constant 0 : i32
    return %c0_i32, %c0_i32_0 : i32, i32
  }
  func.func @transform_5(%arg0: i32, %arg1: i32) -> (i32, i32) {
    %c0_i32 = arith.constant 0 : i32
    %c0_i32_0 = arith.constant 0 : i32
    return %arg0, %c0_i32 : i32, i32
  }
}

</mosaic_0001>

<llo_original>
// kernel: feed_forward.1
$region0: #{feed_forward.1}
  #allocation0 [shape = 'u32[]', space=smem, size = 0x4, offset = 0x4, fixed_abs, tag = 'smem constant byte address 0x4 - core index']
  #allocation1 [shape = 'u32[144,128]{1,0:T(1,128)}', space=vmem, size = 0x12000, scoped, tag = 'internal scratch']
  #allocation2 [shape = 'f32[16,128]{1,0:T(8,128)}', space=vmem, size = 0x2000, scoped, tag = 'scratch operand']
  %s0 = inlined_call_operand.hbm [shape: f32[16,128], index: 0, kind: input, shape index: {}]
  %s1 = inlined_call_operand.hbm [shape: f32[128,256], index: 1, kind: input, shape index: {}]
  %s2 = inlined_call_operand.vmem [shape: f32[1,256], index: 2, kind: input, shape index: {}]
  %s3 = inlined_call_operand.hbm [shape: f32[256,128], index: 3, kind: input, shape index: {}]
  %s4 = inlined_call_operand.vmem [shape: f32[1,128], index: 4, kind: input, shape index: {}]
  %s5 = inlined_call_operand.hbm [shape: f32[16,128], index: 5, kind: output, shape index: {}]
  %s6 = sld [smem:[#allocation0]]
  $region73: #{feed_forward.1} parent=0
    _
  %s8 = ssub.s32 1, %s6
  %s9 = scalar_select 0, %s8, %s6
  $region1: #{feed_forward.1} parent=0
    #allocation3 [shape = 'u8[8192]{0}', space=vmem, size = 0x2000, scoped, tag = 'input window, operand 0, single buffered']
    #allocation4 [shape = 's32[2]{0}', space=sflag, size = 0x8, scoped, tag = 'scoped memory for feed_forward.1']
    #allocation5 [shape = 's32[2]{0}', space=sflag, size = 0x8, scoped, tag = 'scoped memory for feed_forward.1']
    #allocation6 [shape = 'u8[131072]{0}', space=vmem, size = 0x20000, scoped, tag = 'input window, operand 1']
    #allocation7 [shape = 's32[2]{0}', space=sflag, size = 0x8, scoped, tag = 'scoped memory for feed_forward.1']
    #allocation8 [shape = 'u8[131072]{0}', space=vmem, size = 0x20000, scoped, tag = 'input window, operand 3']
    #allocation9 [shape = 'u8[8192]{0}', space=vmem, size = 0x2000, scoped, tag = 'output window, operand 0, single buffered']
    %10 = vsyncpa [#allocation4], 0
    %11 = vsyncpa [#allocation7], 0
    %s12 = scalar_lea.sflag [#allocation7], 1
    %13 = vsyncpa %s12, 0
    %14 = vsyncpa [#allocation5], 0
    loop: start=0, step=1, limit=4
    $region2: #{feed_forward.1} parent=1 // loop_pre_header
      _
    $region3: #{feed_forward.1} parent=1 // loop_header
      %s16 = sphi 0, %s20
      %p17 = scmp.ge.s32.totalorder %s16, 4
      %s23 = sphi 0, %s35
      %s24 = sphi 0, %s31
      %s25 = sphi 0, %s23
      %s26 = sphi 0, %s24
      %s27 = sphi 0, %s25
      %s28 = sphi 0, %s26
      %s38 = sphi 0, %s40
      %s41 = sphi 0, %s38
      %s42 = sphi 0, %s41
      %s58 = sphi 0, %s42
      %s64 = sphi 0, %s66
      %s67 = sphi 0, %s64
      %s68 = sphi 0, %s67
      %s84 = sphi 0, %s68
      %s90 = sphi 0, %s92
      %s93 = sphi 0, %s90
      %s94 = sphi 0, %s93
      %s110 = sphi 0, %s94
      %s116 = sphi 0, %s118
      %s119 = sphi 0, %s116
      %s120 = sphi 0, %s119
      %s136 = sphi 0, %s120
      %s140 = sphi 0, %s140
      %s142 = sphi 0, %s140
      %s143 = sphi 0, %s142
      %s157 = sphi 0, %s143
      %s163 = sphi 0, %s165
      %s166 = sphi 0, %s163
      %s167 = sphi 0, %s166
      %s183 = sphi 0, %s167
    $region4: #{feed_forward.1} parent=1 // loop_header_branch
      %19 = sbr.rel (%p17) target = $region8
    $region5: #{feed_forward.1} parent=1 // loop_body
      %s21 = ssub.s32 %s16, 1
      %s22 = ssub.s32 %s16, 2
      %s29 = sadd.s32 1, %s24
      %p30 = scmp.ge.s32.totalorder %s29, 2
      %s31 = scalar_select %p30, 0, %s29
      %s32 = sadd.s32 1, %s23
      %s33 = scalar_select %p30, %s32, %s23
      %p34 = scmp.ge.s32.totalorder %s33, 1
      %s35 = scalar_select %p34, 0, %s33
      %s36 = ssub.s32 %s23, %s35
      %p37 = scmp.eq.s32.totalorder %s36, 0
      %s39 = sadd.s32 %s38, 1
      %s40 = scalar_select %p37, %s38, %s39
      %p43 = pneg %p37
      %p44 = scmp.eq.s32.totalorder %s16, 1
      %p45 = por %p43, %p44
      %p46 = scmp.ne.s32.totalorder %s38, %s41
      %p47 = scmp.eq.s32.totalorder %s16, 0
      %p48 = por %p46, %p47
      %p49 = scmp.ne.s32.totalorder %s38, %s41
      %p50 = scmp.eq.s32.totalorder %s21, 1
      %p51 = por %p49, %p50
      %p52 = scmp.ne.s32.totalorder %s41, %s42
      %p53 = scmp.eq.s32.totalorder %s21, 0
      %p54 = por %p52, %p53
      %p55 = scmp.ne.s32.totalorder %s41, %s42
      %p56 = scmp.eq.s32.totalorder %s22, 1
      %p57 = por %p55, %p56
      %p59 = scmp.ne.s32.totalorder %s42, %s58
      %p60 = scmp.eq.s32.totalorder %s22, 0
      %p61 = por %p59, %p60
      %s62 = ssub.s32 %s24, %s31
      %p63 = scmp.eq.s32.totalorder %s62, 0
      %s65 = sadd.s32 %s64, 1
      %s66 = scalar_select %p63, %s64, %s65
      %p69 = pneg %p63
      %p70 = scmp.eq.s32.totalorder %s16, 1
      %p71 = por %p69, %p70
      %p72 = scmp.ne.s32.totalorder %s64, %s67
      %p73 = scmp.eq.s32.totalorder %s16, 0
      %p74 = por %p72, %p73
      %p75 = scmp.ne.s32.totalorder %s64, %s67
      %p76 = scmp.eq.s32.totalorder %s21, 1
      %p77 = por %p75, %p76
      %p78 = scmp.ne.s32.totalorder %s67, %s68
      %p79 = scmp.eq.s32.totalorder %s21, 0
      %p80 = por %p78, %p79
      %p81 = scmp.ne.s32.totalorder %s67, %s68
      %p82 = scmp.eq.s32.totalorder %s22, 1
      %p83 = por %p81, %p82
      %p85 = scmp.ne.s32.totalorder %s68, %s84
      %p86 = scmp.eq.s32.totalorder %s22, 0
      %p87 = por %p85, %p86
      %s88 = ssub.s32 %s24, %s31
      %p89 = scmp.eq.s32.totalorder %s88, 0
      %s91 = sadd.s32 %s90, 1
      %s92 = scalar_select %p89, %s90, %s91
      %p95 = pneg %p89
      %p96 = scmp.eq.s32.totalorder %s16, 1
      %p97 = por %p95, %p96
      %p98 = scmp.ne.s32.totalorder %s90, %s93
      %p99 = scmp.eq.s32.totalorder %s16, 0
      %p100 = por %p98, %p99
      %p101 = scmp.ne.s32.totalorder %s90, %s93
      %p102 = scmp.eq.s32.totalorder %s21, 1
      %p103 = por %p101, %p102
      %p104 = scmp.ne.s32.totalorder %s93, %s94
      %p105 = scmp.eq.s32.totalorder %s21, 0
      %p106 = por %p104, %p105
      %p107 = scmp.ne.s32.totalorder %s93, %s94
      %p108 = scmp.eq.s32.totalorder %s22, 1
      %p109 = por %p107, %p108
      %p111 = scmp.ne.s32.totalorder %s94, %s110
      %p112 = scmp.eq.s32.totalorder %s22, 0
      %p113 = por %p111, %p112
      %s114 = ssub.s32 %s24, %s31
      %p115 = scmp.eq.s32.totalorder %s114, 0
      %s117 = sadd.s32 %s116, 1
      %s118 = scalar_select %p115, %s116, %s117
      %p121 = pneg %p115
      %p122 = scmp.eq.s32.totalorder %s16, 1
      %p123 = por %p121, %p122
      %p124 = scmp.ne.s32.totalorder %s116, %s119
      %p125 = scmp.eq.s32.totalorder %s16, 0
      %p126 = por %p124, %p125
      %p127 = scmp.ne.s32.totalorder %s116, %s119
      %p128 = scmp.eq.s32.totalorder %s21, 1
      %p129 = por %p127, %p128
      %p130 = scmp.ne.s32.totalorder %s119, %s120
      %p131 = scmp.eq.s32.totalorder %s21, 0
      %p132 = por %p130, %p131
      %p133 = scmp.ne.s32.totalorder %s119, %s120
      %p134 = scmp.eq.s32.totalorder %s22, 1
      %p135 = por %p133, %p134
      %p137 = scmp.ne.s32.totalorder %s120, %s136
      %p138 = scmp.eq.s32.totalorder %s22, 0
      %p139 = por %p137, %p138
      %s141 = sadd.s32 %s140, 1
      %p144 = scmp.eq.s32.totalorder %s16, 1
      %p145 = scmp.ne.s32.totalorder %s140, %s142
      %p146 = scmp.eq.s32.totalorder %s16, 0
      %p147 = por %p145, %p146
      %p148 = scmp.ne.s32.totalorder %s140, %s142
      %p149 = scmp.eq.s32.totalorder %s21, 1
      %p150 = por %p148, %p149
      %p151 = scmp.ne.s32.totalorder %s142, %s143
      %p152 = scmp.eq.s32.totalorder %s21, 0
      %p153 = por %p151, %p152
      %p154 = scmp.ne.s32.totalorder %s142, %s143
      %p155 = scmp.eq.s32.totalorder %s22, 1
      %p156 = por %p154, %p155
      %p158 = scmp.ne.s32.totalorder %s143, %s157
      %p159 = scmp.eq.s32.totalorder %s22, 0
      %p160 = por %p158, %p159
      %s161 = ssub.s32 %s23, %s35
      %p162 = scmp.eq.s32.totalorder %s161, 0
      %s164 = sadd.s32 %s163, 1
      %s165 = scalar_select %p162, %s163, %s164
      %p168 = pneg %p162
      %p169 = scmp.eq.s32.totalorder %s16, 1
      %p170 = por %p168, %p169
      %p171 = scmp.ne.s32.totalorder %s163, %s166
      %p172 = scmp.eq.s32.totalorder %s16, 0
      %p173 = por %p171, %p172
      %p174 = scmp.ne.s32.totalorder %s163, %s166
      %p175 = scmp.eq.s32.totalorder %s21, 1
      %p176 = por %p174, %p175
      %p177 = scmp.ne.s32.totalorder %s166, %s167
      %p178 = scmp.eq.s32.totalorder %s21, 0
      %p179 = por %p177, %p178
      %p180 = scmp.ne.s32.totalorder %s166, %s167
      %p181 = scmp.eq.s32.totalorder %s22, 1
      %p182 = por %p180, %p181
      %p184 = scmp.ne.s32.totalorder %s167, %s183
      %p185 = scmp.eq.s32.totalorder %s22, 0
      %p186 = por %p184, %p185
      %p187 = scmp.le.s32.totalorder 1, %s16
      %p188 = scmp.lt.s32.totalorder %s16, 3
      %p189 = pnand %p187, %p188
      %p190 = pneg %p189
      // Predicated region
      $region9: #{feed_forward.1} parent=5 // pred_check
        _
      $region10: #{feed_forward.1} parent=5 // pred_check_branch
        %192 = sbr.rel (%p189) target = $region12
      $region11: #{feed_forward.1} parent=5 // pred_region
        %s193 = ssub.s32 %s16, 1
        // Predicated region
        $region13: #{feed_forward.1} parent=11 // pred_check
          %p194 = pneg %p54
        $region14: #{feed_forward.1} parent=11 // pred_check_branch
          %196 = sbr.rel (%p194) target = $region16
        $region15: #{feed_forward.1} parent=11 // pred_region
          %s197 = smul.u32 2, %s25
          %s199 = ssub.s32 256, 256
          %200 = vsyncadd [#allocation4], %s199
          %s201 = smul.addr %s197, 128
          %s202 = scalar_lea.hbm %s0, %s201
          %s203 = sshll.u32 [#allocation3], 4
          %s204 = int_to_ptr.vmem [resolvable:$true] %s203
          %209 = dma.hbm_to_vmem [thread:$0]  %s202, 256, %s204, [#allocation4], 128, 128, 8
        $region16: #{feed_forward.1} parent=11 // pred_fallthru
          _
        // Predicated region
        $region17: #{feed_forward.1} parent=11 // pred_check
          %p210 = pneg %p153
        $region18: #{feed_forward.1} parent=11 // pred_check_branch
          %212 = sbr.rel (%p210) target = $region20
        $region19: #{feed_forward.1} parent=11 // pred_region
          _
        $region20: #{feed_forward.1} parent=11 // pred_fallthru
          _
      $region12: #{feed_forward.1} parent=5 // pred_fallthru
        _
      %p213 = scmp.lt.s32.totalorder %s16, 2
      // Predicated region
      $region21: #{feed_forward.1} parent=5 // pred_check
        %p214 = pneg %p213
      $region22: #{feed_forward.1} parent=5 // pred_check_branch
        %216 = sbr.rel (%p214) target = $region24
      $region23: #{feed_forward.1} parent=5 // pred_region
        // Predicated region
        $region25: #{feed_forward.1} parent=23 // pred_check
          %p217 = pneg %p74
        $region26: #{feed_forward.1} parent=23 // pred_check_branch
          %219 = sbr.rel (%p217) target = $region28
        $region27: #{feed_forward.1} parent=23 // pred_region
          %s220 = sand.u32 %s16, 1
          %s221 = scalar_lea.sflag [#allocation7], %s220
          %s222 = sand.u32 %s64, 1
          %s223 = smul.addr %s222, 128
          %s224 = scalar_lea.vmem [#allocation6], %s223
          %s226 = ssub.s32 2048, 2048
          %227 = vsyncadd %s221, %s226
          %s228 = smul.addr %s24, 128
          %s229 = scalar_lea.hbm %s1, %s228
          %s230 = sshll.u32 %s224, 4
          %s231 = int_to_ptr.vmem [resolvable:$true] %s230
          %236 = dma.hbm_to_vmem [thread:$0]  %s229, 2048, %s231, %s221, 256, 128, 8
        $region28: #{feed_forward.1} parent=23 // pred_fallthru
          _
        // Predicated region
        $region29: #{feed_forward.1} parent=23 // pred_check
          %p237 = pneg %p100
        $region30: #{feed_forward.1} parent=23 // pred_check_branch
          %239 = sbr.rel (%p237) target = $region32
        $region31: #{feed_forward.1} parent=23 // pred_region
          %p240 = scmp.lt.s32.totalorder %s24, 1
          %s241 = scalar_select %p240, %s24, 1
          %s242 = scalar_lea.vmem %s2, %s241
        $region32: #{feed_forward.1} parent=23 // pred_fallthru
          _
        // Predicated region
        $region33: #{feed_forward.1} parent=23 // pred_check
          %p243 = pneg %p126
        $region34: #{feed_forward.1} parent=23 // pred_check_branch
          %245 = sbr.rel (%p243) target = $region36
        $region35: #{feed_forward.1} parent=23 // pred_region
          %s246 = sand.u32 %s16, 1
          %s247 = scalar_lea.sflag [#allocation7], %s246
          %s248 = sand.u32 %s116, 1
          %s249 = smul.addr %s248, 128
          %s250 = scalar_lea.vmem [#allocation8], %s249
          %s251 = smul.u32 16, %s24
          %s253 = ssub.s32 2048, 2048
          %254 = vsyncadd %s247, %s253
          %s255 = smul.addr %s251, 128
          %s256 = scalar_lea.hbm %s3, %s255
          %s257 = sshll.u32 %s250, 4
          %s258 = int_to_ptr.vmem [resolvable:$true] %s257
          %263 = dma.hbm_to_vmem [thread:$0]  %s256, 2048, %s258, %s247, 128, 128, 8
        $region36: #{feed_forward.1} parent=23 // pred_fallthru
          _
      $region24: #{feed_forward.1} parent=5 // pred_fallthru
        _
      %p264 = scmp.le.s32.totalorder 1, %s16
      %p265 = scmp.lt.s32.totalorder %s16, 3
      %p266 = pnand %p264, %p265
      %p267 = pneg %p266
      // Predicated region
      $region37: #{feed_forward.1} parent=5 // pred_check
        _
      $region38: #{feed_forward.1} parent=5 // pred_check_branch
        %269 = sbr.rel (%p266) target = $region40
      $region39: #{feed_forward.1} parent=5 // pred_region
        %s270 = ssub.s32 %s16, 1
        // Predicated region
        $region41: #{feed_forward.1} parent=39 // pred_check
          %p271 = pneg %p54
        $region42: #{feed_forward.1} parent=39 // pred_check_branch
          %273 = sbr.rel (%p271) target = $region44
        $region43: #{feed_forward.1} parent=39 // pred_region
          %274 = dma.done [#allocation4], 256
        $region44: #{feed_forward.1} parent=39 // pred_fallthru
          _
        %s275 = sand.u32 %s21, 1
        %s276 = scalar_lea.sflag [#allocation7], %s275
        %s277 = sand.u32 %s67, 1
        %s278 = smul.addr %s277, 128
        %s279 = scalar_lea.vmem [#allocation6], %s278
        // Predicated region
        $region45: #{feed_forward.1} parent=39 // pred_check
          %p280 = pneg %p80
        $region46: #{feed_forward.1} parent=39 // pred_check_branch
          %282 = sbr.rel (%p280) target = $region48
        $region47: #{feed_forward.1} parent=39 // pred_region
          %283 = dma.done %s276, 2048
        $region48: #{feed_forward.1} parent=39 // pred_fallthru
          _
        %s284 = sand.u32 %s21, 1
        %s285 = scalar_lea.sflag [#allocation7], %s284
        %s286 = sand.u32 %s119, 1
        %s287 = smul.addr %s286, 128
        %s288 = scalar_lea.vmem [#allocation8], %s287
        // Predicated region
        $region49: #{feed_forward.1} parent=39 // pred_check
          %p289 = pneg %p132
        $region50: #{feed_forward.1} parent=39 // pred_check_branch
          %291 = sbr.rel (%p289) target = $region52
        $region51: #{feed_forward.1} parent=39 // pred_region
          %292 = dma.done %s285, 2048
        $region52: #{feed_forward.1} parent=39 // pred_fallthru
          _
        %p293 = pneg %p54
        %p294 = pneg %p51
        %s295 = sand.u32 %s21, 1
        %s296 = scalar_lea.sflag [#allocation7], %s295
        %s297 = sand.u32 %s67, 1
        %s298 = smul.addr %s297, 128
        %s299 = scalar_lea.vmem [#allocation6], %s298
        %p300 = pneg %p80
        %p301 = pneg %p77
        %p302 = scmp.lt.s32.totalorder %s26, 1
        %s303 = scalar_select %p302, %s26, 1
        %s304 = scalar_lea.vmem %s2, %s303
        %p305 = pneg %p106
        %p306 = pneg %p103
        %s307 = sand.u32 %s21, 1
        %s308 = scalar_lea.sflag [#allocation7], %s307
        %s309 = sand.u32 %s119, 1
        %s310 = smul.addr %s309, 128
        %s311 = scalar_lea.vmem [#allocation8], %s310
        %p312 = pneg %p132
        %p313 = pneg %p129
        %p314 = pneg %p153
        %p315 = pneg %p150
        %p316 = pneg %p179
        %p317 = pneg %p176
        %s318 = smul.u32 2, %s25
        %p319 = scmp.lt.s32.totalorder %s26, 1
        %s320 = scalar_select %p319, %s26, 1
        %s321 = scalar_lea.vmem %s2, %s320
        %s322 = smul.u32 16, %s26
        %s323 = smul.u32 2, %s25
        %p324 = scmp.eq.s32.totalorder %s26, 0
        // Predicated region
        $region53: #{feed_forward.1} parent=39 // pred_check
          %p325 = pneg %p324
        $region54: #{feed_forward.1} parent=39 // pred_check_branch
          %327 = sbr.rel (%p325) target = $region56
        $region55: #{feed_forward.1} parent=39 // pred_region
          %328 = vst [vmem:[#allocation2] sm:$0xff] 0.0
          %329 = vst [vmem:[#allocation2 + $0x8] sm:$0xff] 0.0
        $region56: #{feed_forward.1} parent=39 // pred_fallthru
          _
        %v330 = vld [vmem:[#allocation3] sm:$0xff]
        %v331 = vld [vmem:[#allocation3 + $0x8] sm:$0xff]
        %v332 = vld [vmem:[%s279] sm:$0xff]
        %v333 = vld [vmem:[%s279 + $0x8] sm:$0xff]
        %v334 = vld [vmem:[%s279 + $0x10] sm:$0xff]
        %v335 = vld [vmem:[%s279 + $0x18] sm:$0xff]
        %v336 = vld [vmem:[%s279 + $0x20] sm:$0xff]
        %v337 = vld [vmem:[%s279 + $0x28] sm:$0xff]
        %v338 = vld [vmem:[%s279 + $0x30] sm:$0xff]
        %v339 = vld [vmem:[%s279 + $0x38] sm:$0xff]
        %v340 = vld [vmem:[%s279 + $0x40] sm:$0xff]
        %v341 = vld [vmem:[%s279 + $0x48] sm:$0xff]
        %v342 = vld [vmem:[%s279 + $0x50] sm:$0xff]
        %v343 = vld [vmem:[%s279 + $0x58] sm:$0xff]
        %v344 = vld [vmem:[%s279 + $0x60] sm:$0xff]
        %v345 = vld [vmem:[%s279 + $0x68] sm:$0xff]
        %v346 = vld [vmem:[%s279 + $0x70] sm:$0xff]
        %v347 = vld [vmem:[%s279 + $0x78] sm:$0xff]
        %v348 = vld [vmem:[%s321] sm:$0x1]
        %v350 = vlaneseq
        %v351 = vshrl.u32 %v350, 7
        %v352 = vsub.s32 0, %v351
        %v353 = vrot.slane %v348, %v352
        %355 = vmatprep.subr.mxu0 0.0
        %356 = vmatpush1.msra.mxu0 %v332
        %357 = vmatprep.subr.mxu0 0.0
        %358 = vmatpush1.msra.mxu0 %v333
        %359 = vmatprep.subr.mxu0 0.0
        %360 = vmatpush1.msra.mxu0 %v334
        %361 = vmatprep.subr.mxu0 0.0
        %362 = vmatpush1.msra.mxu0 %v335
        %363 = vmatprep.subr.mxu0 0.0
        %364 = vmatpush1.msra.mxu0 %v336
        %365 = vmatprep.subr.mxu0 0.0
        %366 = vmatpush1.msra.mxu0 %v337
        %367 = vmatprep.subr.mxu0 0.0
        %368 = vmatpush1.msra.mxu0 %v338
        %369 = vmatprep.subr.mxu0 0.0
        %370 = vmatpush1.msra.mxu0 %v339
        %371 = vmatprep.subr.mxu0 0.0
        %372 = vmatpush1.msra.mxu0 %v340
        %373 = vmatprep.subr.mxu0 0.0
        %374 = vmatpush1.msra.mxu0 %v341
        %375 = vmatprep.subr.mxu0 0.0
        %376 = vmatpush1.msra.mxu0 %v342
        %377 = vmatprep.subr.mxu0 0.0
        %378 = vmatpush1.msra.mxu0 %v343
        %379 = vmatprep.subr.mxu0 0.0
        %380 = vmatpush1.msra.mxu0 %v344
        %381 = vmatprep.subr.mxu0 0.0
        %382 = vmatpush1.msra.mxu0 %v345
        %383 = vmatprep.subr.mxu0 0.0
        %384 = vmatpush1.msra.mxu0 %v346
        %385 = vmatprep.subr.mxu0 0.0
        %386 = vmatpush1.msra.mxu0 %v347
        %387 = vmatprep.subr.mxu0 0.0
        %388 = vmatpush1.msra.mxu0 0.0
        %389 = vmatprep.subr.mxu0 0.0
        %390 = vmatpush1.msra.mxu0 0.0
        %391 = vmatprep.subr.mxu0 0.0
        %392 = vmatpush1.msra.mxu0 0.0
        %393 = vmatprep.subr.mxu0 0.0
        %394 = vmatpush1.msra.mxu0 0.0
        %395 = vmatprep.subr.mxu0 0.0
        %396 = vmatpush1.msra.mxu0 0.0
        %397 = vmatprep.subr.mxu0 0.0
        %398 = vmatpush1.msra.mxu0 0.0
        %399 = vmatprep.subr.mxu0 0.0
        %400 = vmatpush1.msra.mxu0 0.0
        %401 = vmatprep.subr.mxu0 0.0
        %402 = vmatpush1.msra.mxu0 0.0
        %403 = vmatprep.subr.mxu0 0.0
        %404 = vmatpush1.msra.mxu0 0.0
        %405 = vmatprep.subr.mxu0 0.0
        %406 = vmatpush1.msra.mxu0 0.0
        %407 = vmatprep.subr.mxu0 0.0
        %408 = vmatpush1.msra.mxu0 0.0
        %409 = vmatprep.subr.mxu0 0.0
        %410 = vmatpush1.msra.mxu0 0.0
        %411 = vmatprep.subr.mxu0 0.0
        %412 = vmatpush1.msra.mxu0 0.0
        %413 = vmatprep.subr.mxu0 0.0
        %414 = vmatpush1.msra.mxu0 0.0
        %415 = vmatprep.subr.mxu0 0.0
        %416 = vmatpush1.msra.mxu0 0.0
        %417 = vmatprep.subr.mxu0 0.0
        %418 = vmatpush1.msra.mxu0 0.0
        %419 = vmatprep.mubr.f32.mxu0 0.0
        %420 = vmatmul.mubr.f32.gmra.mrb[0].mxu0 %v330
        %v421 = vpop.f32.mrb[0].mxu0
        %v422 = vadd.f32 %v353, %v421
        %v423 = vpop.f32.mrb[0].mxu0
        %424 = vmatprep.mubr.f32.mxu0 0.0
        %425 = vmatmul.mubr.f32.gmra.mrb[0].mxu0 %v331
        %v426 = vpop.f32.mrb[0].mxu0
        %v427 = vadd.f32 %v353, %v426
        %v428 = vpop.f32.mrb[0].mxu0
        %429 = vdwg.mxu0
        %v430 = vmax.f32 %v422, 0.0
        %v431 = vmax.f32 %v427, 0.0
        %v432 = vld [vmem:[#allocation2] sm:$0xff]
        %v433 = vld [vmem:[#allocation2 + $0x8] sm:$0xff]
        %v434 = vld [vmem:[%s288] sm:$0xff]
        %v435 = vld [vmem:[%s288 + $0x8] sm:$0xff]
        %v436 = vld [vmem:[%s288 + $0x10] sm:$0xff]
        %v437 = vld [vmem:[%s288 + $0x18] sm:$0xff]
        %v438 = vld [vmem:[%s288 + $0x20] sm:$0xff]
        %v439 = vld [vmem:[%s288 + $0x28] sm:$0xff]
        %v440 = vld [vmem:[%s288 + $0x30] sm:$0xff]
        %v441 = vld [vmem:[%s288 + $0x38] sm:$0xff]
        %v442 = vld [vmem:[%s288 + $0x40] sm:$0xff]
        %v443 = vld [vmem:[%s288 + $0x48] sm:$0xff]
        %v444 = vld [vmem:[%s288 + $0x50] sm:$0xff]
        %v445 = vld [vmem:[%s288 + $0x58] sm:$0xff]
        %v446 = vld [vmem:[%s288 + $0x60] sm:$0xff]
        %v447 = vld [vmem:[%s288 + $0x68] sm:$0xff]
        %v448 = vld [vmem:[%s288 + $0x70] sm:$0xff]
        %v449 = vld [vmem:[%s288 + $0x78] sm:$0xff]
        %450 = vmatprep.subr.mxu0 0.0
        %451 = vmatpush1.msra.mxu0 %v434
        %452 = vmatprep.subr.mxu0 0.0
        %453 = vmatpush1.msra.mxu0 %v435
        %454 = vmatprep.subr.mxu0 0.0
        %455 = vmatpush1.msra.mxu0 %v436
        %456 = vmatprep.subr.mxu0 0.0
        %457 = vmatpush1.msra.mxu0 %v437
        %458 = vmatprep.subr.mxu0 0.0
        %459 = vmatpush1.msra.mxu0 %v438
        %460 = vmatprep.subr.mxu0 0.0
        %461 = vmatpush1.msra.mxu0 %v439
        %462 = vmatprep.subr.mxu0 0.0
        %463 = vmatpush1.msra.mxu0 %v440
        %464 = vmatprep.subr.mxu0 0.0
        %465 = vmatpush1.msra.mxu0 %v441
        %466 = vmatprep.subr.mxu0 0.0
        %467 = vmatpush1.msra.mxu0 %v442
        %468 = vmatprep.subr.mxu0 0.0
        %469 = vmatpush1.msra.mxu0 %v443
        %470 = vmatprep.subr.mxu0 0.0
        %471 = vmatpush1.msra.mxu0 %v444
        %472 = vmatprep.subr.mxu0 0.0
        %473 = vmatpush1.msra.mxu0 %v445
        %474 = vmatprep.subr.mxu0 0.0
        %475 = vmatpush1.msra.mxu0 %v446
        %476 = vmatprep.subr.mxu0 0.0
        %477 = vmatpush1.msra.mxu0 %v447
        %478 = vmatprep.subr.mxu0 0.0
        %479 = vmatpush1.msra.mxu0 %v448
        %480 = vmatprep.subr.mxu0 0.0
        %481 = vmatpush1.msra.mxu0 %v449
        %482 = vmatprep.subr.mxu0 0.0
        %483 = vmatpush1.msra.mxu0 0.0
        %484 = vmatprep.subr.mxu0 0.0
        %485 = vmatpush1.msra.mxu0 0.0
        %486 = vmatprep.subr.mxu0 0.0
        %487 = vmatpush1.msra.mxu0 0.0
        %488 = vmatprep.subr.mxu0 0.0
        %489 = vmatpush1.msra.mxu0 0.0
        %490 = vmatprep.subr.mxu0 0.0
        %491 = vmatpush1.msra.mxu0 0.0
        %492 = vmatprep.subr.mxu0 0.0
        %493 = vmatpush1.msra.mxu0 0.0
        %494 = vmatprep.subr.mxu0 0.0
        %495 = vmatpush1.msra.mxu0 0.0
        %496 = vmatprep.subr.mxu0 0.0
        %497 = vmatpush1.msra.mxu0 0.0
        %498 = vmatprep.subr.mxu0 0.0
        %499 = vmatpush1.msra.mxu0 0.0
        %500 = vmatprep.subr.mxu0 0.0
        %501 = vmatpush1.msra.mxu0 0.0
        %502 = vmatprep.subr.mxu0 0.0
        %503 = vmatpush1.msra.mxu0 0.0
        %504 = vmatprep.subr.mxu0 0.0
        %505 = vmatpush1.msra.mxu0 0.0
        %506 = vmatprep.subr.mxu0 0.0
        %507 = vmatpush1.msra.mxu0 0.0
        %508 = vmatprep.subr.mxu0 0.0
        %509 = vmatpush1.msra.mxu0 0.0
        %510 = vmatprep.subr.mxu0 0.0
        %511 = vmatpush1.msra.mxu0 0.0
        %512 = vmatprep.subr.mxu0 0.0
        %513 = vmatpush1.msra.mxu0 0.0
        %514 = vmatprep.mubr.f32.mxu0 0.0
        %515 = vmatmul.mubr.f32.gmra.mrb[0].mxu0 %v430
        %v516 = vpop.f32.mrb[0].mxu0
        %v517 = vadd.f32 0.0, %v516
        %v518 = vpop.f32.mrb[0].mxu0
        %519 = vmatprep.mubr.f32.mxu0 0.0
        %520 = vmatmul.mubr.f32.gmra.mrb[0].mxu0 %v431
        %v521 = vpop.f32.mrb[0].mxu0
        %v522 = vadd.f32 0.0, %v521
        %v523 = vpop.f32.mrb[0].mxu0
        %524 = vdwg.mxu0
        %v525 = vadd.f32 %v432, %v517
        %v526 = vadd.f32 %v433, %v522
        %527 = vst [vmem:[#allocation2] sm:$0xff] %v525
        %528 = vst [vmem:[#allocation2 + $0x8] sm:$0xff] %v526
        %p529 = scmp.eq.s32.totalorder %s26, 1
        // Predicated region
        $region57: #{feed_forward.1} parent=39 // pred_check
          %p530 = pneg %p529
        $region58: #{feed_forward.1} parent=39 // pred_check_branch
          %532 = sbr.rel (%p530) target = $region60
        $region59: #{feed_forward.1} parent=39 // pred_region
          %v533 = vld [vmem:[#allocation2] sm:$0xff]
          %v534 = vld [vmem:[#allocation2 + $0x8] sm:$0xff]
          %v535 = vld [vmem:[%s4] sm:$0x1]
          %v537 = vlaneseq
          %v538 = vshrl.u32 %v537, 7
          %v539 = vsub.s32 0, %v538
          %v540 = vrot.slane %v535, %v539
          %v542 = vadd.f32 %v533, %v540
          %v543 = vadd.f32 %v534, %v540
          %544 = vst [vmem:[#allocation9] sm:$0xff] %v542
          %545 = vst [vmem:[#allocation9 + $0x8] sm:$0xff] %v543
        $region60: #{feed_forward.1} parent=39 // pred_fallthru
          _
        // Predicated region
        $region61: #{feed_forward.1} parent=39 // pred_check
          %p546 = pneg %p176
        $region62: #{feed_forward.1} parent=39 // pred_check_branch
          %548 = sbr.rel (%p546) target = $region64
        $region63: #{feed_forward.1} parent=39 // pred_region
          %s549 = smul.u32 2, %s25
          %s551 = ssub.s32 256, 256
          %552 = vsyncadd [#allocation5], %s551
          %s553 = smul.addr %s549, 128
          %s554 = scalar_lea.hbm %s5, %s553
          %s555 = sshll.u32 [#allocation9], 4
          %s556 = int_to_ptr.vmem [resolvable:$true] %s555
          %561 = dma.vmem_to_hbm [thread:$0]  %s556, 256, %s554, [#allocation5], 128, 128, 8
        $region64: #{feed_forward.1} parent=39 // pred_fallthru
          _
        // Predicated region
        $region65: #{feed_forward.1} parent=39 // pred_check
          %p562 = pneg %p176
        $region66: #{feed_forward.1} parent=39 // pred_check_branch
          %564 = sbr.rel (%p562) target = $region68
        $region67: #{feed_forward.1} parent=39 // pred_region
          %565 = dma.done [#allocation5], 256
        $region68: #{feed_forward.1} parent=39 // pred_fallthru
          _
      $region40: #{feed_forward.1} parent=5 // pred_fallthru
        _
      %p566 = scmp.le.s32.totalorder 2, %s16
      // Predicated region
      $region69: #{feed_forward.1} parent=5 // pred_check
        %p567 = pneg %p566
      $region70: #{feed_forward.1} parent=5 // pred_check_branch
        %569 = sbr.rel (%p567) target = $region72
      $region71: #{feed_forward.1} parent=5 // pred_region
        %s570 = ssub.s32 %s16, 2
      $region72: #{feed_forward.1} parent=5 // pred_fallthru
        _
    $region6: #{feed_forward.1} parent=1 // loop_footer
      %s20 = sadd.s32 1, %s16
    $region7: #{feed_forward.1} parent=1 // loop_footer_branch
      %15 = sbr.rel target = $region3
    $region8: #{feed_forward.1} parent=1 // loop_exit
      _
    %571 = vsyncpa [#allocation4], 1
    %s572 = scalar_lea.sflag [#allocation4], 1
    %573 = vsyncpa %s572, 1
    %574 = vsyncpa [#allocation7], 1
    %s575 = scalar_lea.sflag [#allocation7], 1
    %576 = vsyncpa %s575, 1
    %577 = vsyncpa [#allocation5], 1
    %s578 = scalar_lea.sflag [#allocation5], 1
    %579 = vsyncpa %s578, 1

</llo_original>
